<compile_context>
chip_gen: v5e
topology: v5e:2x2
jax: 0.10.0
libtpu: 0.0.40
codegen_flags: <defaults>
</compile_context>

<pallas_src>
import functools

import jax
import jax.numpy as jnp
import numpy as np
from jax.experimental import pallas as pl
from jax.experimental.pallas import tpu as pltpu


_LANE = 128            # lane width (last-dim tiling unit)
_ROW_QUANT = 16        # bf16 sublane packing -> row-tile quantum
_NEG_PAD = -1e30       # bias pad for softmax layers: exp(pad - max) == 0.0
_MAX_TILE_N = 512      # row-tile upper bound
_ACT_BUDGET = 8 << 20  # ~8 MiB budget for per-tile f32 activations


def _round_up(x, m):
    return (x + m - 1) // m * m


# ---------------------------------------------------------------------------
# Fused MLP kernel builder.
# refs = (x_ref, W0, b0, W1, b1, ..., W_{L-1}, b_{L-1}, o_ref)
# Hidden layers use `hidden_act`; the last layer is always a row softmax.
# Matmuls: bf16 operands, f32 accumulation on the MXU.  Activations: f32.
# ---------------------------------------------------------------------------
def _make_fused_kernel(n_linear, hidden_act):
    def _softmax_rows(s, exact_div):
        m = jnp.max(s, axis=1, keepdims=True)          # XLU lane reduce
        e = jnp.exp(s - m)                              # EUP
        denom = jnp.sum(e, axis=1, keepdims=True)       # XLU lane reduce
        if exact_div:
            # Final-layer output: exact divide keeps rows summing to 1
            # within f32 rounding.
            return e / denom
        # Hidden layers are re-quantised to bf16 anyway; the approx
        # reciprocal's ~2^-12 error is negligible and runs on the EUP slot.
        return e * pl.reciprocal(denom, approx=True)

    def kernel(x_ref, *refs):
        o_ref = refs[-1]
        wb = refs[:-1]
        h = x_ref[...]                                   # bf16 (TILE_N, D_pad)
        for i in range(n_linear):
            w_ref, b_ref = wb[2 * i], wb[2 * i + 1]
            s = jnp.dot(h, w_ref[...], preferred_element_type=jnp.float32)
            s = s + b_ref[...]                           # (1, K_pad) broadcast
            if i < n_linear - 1:
                if hidden_act == "relu":
                    a = jnp.maximum(s, 0.0)              # padded cols stay 0
                else:                                    # "softmax"
                    a = _softmax_rows(s, exact_div=False)  # padded cols -> 0
                h = a.astype(jnp.bfloat16)               # next MXU operand
            else:
                # Lane-dense (multiple-of-128) unmasked f32 store.
                o_ref[...] = _softmax_rows(s, exact_div=True)

    return kernel


@functools.partial(jax.jit, static_argnames=("hidden_act", "tile_n"))
def _fused_forward(x_pad, w_pads, b_pads, *, hidden_act, tile_n):
    n_pad, d_pad = x_pad.shape
    c_pad = w_pads[-1].shape[1]
    n_linear = len(w_pads)
    grid = (n_pad // tile_n,)

    # X / output are tiled over rows; weights & biases stay VMEM-resident
    # across the whole grid (constant index_map -> fetched once, no re-DMA).
    in_specs = [pl.BlockSpec((tile_n, d_pad), lambda i: (i, 0))]
    flat_params = []
    for w, b in zip(w_pads, b_pads):
        in_specs.append(pl.BlockSpec(w.shape, lambda i: (0, 0)))
        in_specs.append(pl.BlockSpec(b.shape, lambda i: (0, 0)))
        flat_params += [w, b]
    out_specs = pl.BlockSpec((tile_n, c_pad), lambda i: (i, 0))

    return pl.pallas_call(
        _make_fused_kernel(n_linear, hidden_act),
        out_shape=jax.ShapeDtypeStruct((n_pad, c_pad), jnp.float32),
        grid=grid,
        in_specs=in_specs,
        out_specs=out_specs,
        compiler_params=pltpu.CompilerParams(
            dimension_semantics=("parallel",)),   # shard rows across TCs (v7x)
    )(x_pad, *flat_params)


# ---------------------------------------------------------------------------
# PTDeep re-implementation (forward only).
# ---------------------------------------------------------------------------
class PTDeepPallas:
    def __init__(self, config, activation, key):
        self.activation = activation
        self.layers = len(config) - 1
        self.config = list(config)
        self.out_dim = config[-1]

        # Raw params (mirror np.random.randn shapes of the torch module).
        self.W, self.b = [], []
        for i in range(self.layers):
            key, kw, kb = jax.random.split(key, 3)
            self.W.append(jax.random.normal(kw, (config[i], config[i + 1]),
                                            dtype=jnp.float32))
            self.b.append(jax.random.normal(kb, (config[i + 1],),
                                            dtype=jnp.float32))

        # Which linear layers actually run (the torch code skips the hidden
        # layers entirely when the activation string is unrecognised).
        if activation in ("relu", "softmax"):
            self._active = list(range(self.layers))
        else:
            self._active = [self.layers - 1]

        # ---- hoisted, one-time kernel-side prep: pad + cast (done once) ----
        w_pads, b_pads = [], []
        for li, idx in enumerate(self._active):
            w, b = self.W[idx], self.b[idx]
            d, k = w.shape
            d_pad, k_pad = _round_up(d, _LANE), _round_up(k, _LANE)
            w_p = jnp.zeros((d_pad, k_pad), jnp.float32).at[:d, :k].set(w)
            is_last = li == len(self._active) - 1
            layer_act = "softmax" if is_last else activation
            pad_val = _NEG_PAD if layer_act == "softmax" else 0.0
            b_p = jnp.full((1, k_pad), pad_val, jnp.float32).at[0, :k].set(b)
            w_pads.append(w_p.astype(jnp.bfloat16))   # bf16 MXU operand
            b_pads.append(b_p)                        # bias stays f32
        self._w_pads = tuple(w_pads)
        self._b_pads = tuple(b_pads)
        self._d_in = self.W[self._active[0]].shape[0]
        self._d_in_pad = self._w_pads[0].shape[0]

        # Row-tile cap: largest multiple of 16 keeping the widest per-tile f32
        # activation (plus headroom for exp/denominator temporaries) under the
        # budget; weights are small and VMEM-resident on top of that.
        max_dim_pad = max([self._d_in_pad] + [w.shape[1] for w in w_pads])
        bytes_per_row = max_dim_pad * 4 * 3            # ~3 live f32 copies
        cap = (_ACT_BUDGET // bytes_per_row) // _ROW_QUANT * _ROW_QUANT
        self._tile_cap = int(max(_ROW_QUANT, min(_MAX_TILE_N, cap)))

    def forward(self, X):
        X = jnp.asarray(X, dtype=jnp.float32)
        n, d = X.shape
        assert d == self._d_in, "feature dim mismatch"
        # Row tile: multiple of 16 (bf16 sublane packing), biggest under the
        # VMEM budget -> fewer grid steps, unmasked loads/stores.
        tile_n = (_round_up(n, _ROW_QUANT) if n <= self._tile_cap
                  else self._tile_cap)
        n_pad = _round_up(n, tile_n)
        x_pad = (jnp.zeros((n_pad, self._d_in_pad), jnp.float32)
                 .at[:n, :d].set(X)).astype(jnp.bfloat16)
        out_pad = _fused_forward(x_pad, self._w_pads, self._b_pads,
                                 hidden_act=self.activation, tile_n=tile_n)
        return out_pad[:n, :self.out_dim]

    # Pure-JAX reference (unpadded) that mirrors the kernel's precision
    # policy: bf16 matmul operands, f32 accumulation and activation math.
    def forward_ref(self, X):
        h = jnp.asarray(X, dtype=jnp.float32)
        for li, idx in enumerate(self._active):
            s = jnp.dot(h.astype(jnp.bfloat16),
                        self.W[idx].astype(jnp.bfloat16),
                        preferred_element_type=jnp.float32) + self.b[idx]
            is_last = li == len(self._active) - 1
            if is_last or self.activation == "softmax":
                h = jax.nn.softmax(s, axis=1)
            else:
                h = jax.nn.relu(s)
        return h


if __name__ == "__main__":
    key = jax.random.PRNGKey(0)
    key, kx, kp = jax.random.split(key, 3)

    # Small shapes consistent with the module: config = [D, H1, H2, C].
    config = [16, 32, 32, 8]
    batch = 8
    X = jax.random.normal(kx, (batch, config[0]), dtype=jnp.float32)

    # relu hidden activation (primary path)
    model = PTDeepPallas(config, activation="relu", key=kp)
    out = jax.block_until_ready(model.forward(X))
    ref = jax.block_until_ready(model.forward_ref(X))
    np.testing.assert_allclose(np.asarray(out), np.asarray(ref),
                               rtol=1e-3, atol=1e-4)
    # Final softmax rows must sum to 1 (padding must not pollute the denom).
    np.testing.assert_allclose(np.asarray(out).sum(axis=1), np.ones(batch),
                               rtol=1e-5, atol=1e-5)

    # softmax hidden activation (secondary path); looser tolerance since the
    # hidden softmax outputs are re-quantised to bf16 between layers (and use
    # the approx EUP reciprocal, whose error is far below bf16 epsilon).
    model_sm = PTDeepPallas(config, activation="softmax", key=kp)
    out_sm = jax.block_until_ready(model_sm.forward(X))
    ref_sm = jax.block_until_ready(model_sm.forward_ref(X))
    np.testing.assert_allclose(np.asarray(out_sm), np.asarray(ref_sm),
                               rtol=2e-2, atol=2e-3)
    np.testing.assert_allclose(np.asarray(out_sm).sum(axis=1), np.ones(batch),
                               rtol=1e-5, atol=1e-5)

    print("KERNEL_OK")
</pallas_src>

<mosaic_0001>
module attributes {stable_mosaic.version = 11 : i64} {
  func.func @kernel(%arg0: i32, %arg1: memref<16x128xbf16, #tpu.memory_space<vmem>>, %arg2: memref<128x128xbf16, #tpu.memory_space<vmem>>, %arg3: memref<1x128xf32, #tpu.memory_space<vmem>>, %arg4: memref<128x128xbf16, #tpu.memory_space<vmem>>, %arg5: memref<1x128xf32, #tpu.memory_space<vmem>>, %arg6: memref<128x128xbf16, #tpu.memory_space<vmem>>, %arg7: memref<1x128xf32, #tpu.memory_space<vmem>>, %arg8: memref<16x128xf32, #tpu.memory_space<vmem>>) attributes {dimension_semantics = [#tpu.dimension_semantics<parallel>], iteration_bounds = array<i64: 1>, scalar_prefetch = 0 : i64, scratch_operands = 0 : i64, tpu.core_type = #tpu.core_type<tc>, window_params = [{transform_indices = @transform_0, window_bounds = array<i64: 16, 128>}, {pipeline_mode = #tpu.pipeline_mode<synchronous>, transform_indices = @transform_1, window_bounds = array<i64: 128, 128>}, {pipeline_mode = #tpu.pipeline_mode<synchronous>, transform_indices = @transform_2, window_bounds = array<i64: 1, 128>}, {pipeline_mode = #tpu.pipeline_mode<synchronous>, transform_indices = @transform_3, window_bounds = array<i64: 128, 128>}, {pipeline_mode = #tpu.pipeline_mode<synchronous>, transform_indices = @transform_4, window_bounds = array<i64: 1, 128>}, {pipeline_mode = #tpu.pipeline_mode<synchronous>, transform_indices = @transform_5, window_bounds = array<i64: 128, 128>}, {pipeline_mode = #tpu.pipeline_mode<synchronous>, transform_indices = @transform_6, window_bounds = array<i64: 1, 128>}, {transform_indices = @transform_7, window_bounds = array<i64: 16, 128>}]} {
    %c0 = arith.constant 0 : index
    %c0_0 = arith.constant 0 : index
    %0 = vector.load %arg1[%c0, %c0_0] : memref<16x128xbf16, #tpu.memory_space<vmem>>, vector<16x128xbf16>
    %c0_1 = arith.constant 0 : index
    %c0_2 = arith.constant 0 : index
    %1 = vector.load %arg2[%c0_1, %c0_2] : memref<128x128xbf16, #tpu.memory_space<vmem>>, vector<128x128xbf16>
    %cst = arith.constant dense<0.000000e+00> : vector<16x128xf32>
    %2 = tpu.matmul %0, %1, %cst {dimension_numbers = #tpu.dot_dimension_numbers<[1], [0], [0], [1], [0, 0, 1, 1], [], []>} : vector<16x128xbf16>, vector<128x128xbf16>, vector<16x128xf32> -> vector<16x128xf32>
    %c0_3 = arith.constant 0 : index
    %c0_4 = arith.constant 0 : index
    %3 = vector.load %arg3[%c0_3, %c0_4] : memref<1x128xf32, #tpu.memory_space<vmem>>, vector<1x128xf32>
    %4 = vector.broadcast %3 : vector<1x128xf32> to vector<16x128xf32>
    %5 = arith.addf %2, %4 : vector<16x128xf32>
    %cst_5 = arith.constant 0.000000e+00 : f32
    %6 = vector.broadcast %cst_5 : f32 to vector<16x128xf32>
    %7 = arith.maximumf %5, %6 : vector<16x128xf32>
    %8 = arith.truncf %7 : vector<16x128xf32> to vector<16x128xbf16>
    %c0_6 = arith.constant 0 : index
    %c0_7 = arith.constant 0 : index
    %9 = vector.load %arg4[%c0_6, %c0_7] : memref<128x128xbf16, #tpu.memory_space<vmem>>, vector<128x128xbf16>
    %cst_8 = arith.constant dense<0.000000e+00> : vector<16x128xf32>
    %10 = tpu.matmul %8, %9, %cst_8 {dimension_numbers = #tpu.dot_dimension_numbers<[1], [0], [0], [1], [0, 0, 1, 1], [], []>} : vector<16x128xbf16>, vector<128x128xbf16>, vector<16x128xf32> -> vector<16x128xf32>
    %c0_9 = arith.constant 0 : index
    %c0_10 = arith.constant 0 : index
    %11 = vector.load %arg5[%c0_9, %c0_10] : memref<1x128xf32, #tpu.memory_space<vmem>>, vector<1x128xf32>
    %12 = vector.broadcast %11 : vector<1x128xf32> to vector<16x128xf32>
    %13 = arith.addf %10, %12 : vector<16x128xf32>
    %cst_11 = arith.constant 0.000000e+00 : f32
    %14 = vector.broadcast %cst_11 : f32 to vector<16x128xf32>
    %15 = arith.maximumf %13, %14 : vector<16x128xf32>
    %16 = arith.truncf %15 : vector<16x128xf32> to vector<16x128xbf16>
    %c0_12 = arith.constant 0 : index
    %c0_13 = arith.constant 0 : index
    %17 = vector.load %arg6[%c0_12, %c0_13] : memref<128x128xbf16, #tpu.memory_space<vmem>>, vector<128x128xbf16>
    %cst_14 = arith.constant dense<0.000000e+00> : vector<16x128xf32>
    %18 = tpu.matmul %16, %17, %cst_14 {dimension_numbers = #tpu.dot_dimension_numbers<[1], [0], [0], [1], [0, 0, 1, 1], [], []>} : vector<16x128xbf16>, vector<128x128xbf16>, vector<16x128xf32> -> vector<16x128xf32>
    %c0_15 = arith.constant 0 : index
    %c0_16 = arith.constant 0 : index
    %19 = vector.load %arg7[%c0_15, %c0_16] : memref<1x128xf32, #tpu.memory_space<vmem>>, vector<1x128xf32>
    %20 = vector.broadcast %19 : vector<1x128xf32> to vector<16x128xf32>
    %21 = arith.addf %18, %20 : vector<16x128xf32>
    %cst_17 = arith.constant dense<0xFF800000> : vector<16xf32>
    %22 = vector.multi_reduction <maximumf>, %21, %cst_17 [1] : vector<16x128xf32> to vector<16xf32>
    %23 = vector.shape_cast %22 : vector<16xf32> to vector<16x1xf32>
    %24 = vector.broadcast %23 : vector<16x1xf32> to vector<16x128xf32>
    %25 = arith.subf %21, %24 : vector<16x128xf32>
    %26 = math.exp %25 : vector<16x128xf32>
    %cst_18 = arith.constant dense<0.000000e+00> : vector<16xf32>
    %27 = vector.multi_reduction <add>, %26, %cst_18 [1] : vector<16x128xf32> to vector<16xf32>
    %28 = vector.shape_cast %27 : vector<16xf32> to vector<16x1xf32>
    %29 = vector.broadcast %28 : vector<16x1xf32> to vector<16x128xf32>
    %30 = arith.divf %26, %29 : vector<16x128xf32>
    %c0_19 = arith.constant 0 : index
    %c0_20 = arith.constant 0 : index
    %31 = vector.load %arg8[%c0_19, %c0_20] : memref<16x128xf32, #tpu.memory_space<vmem>>, vector<16x128xf32>
    tpu.vector_store %arg8[%c0_19, %c0_20], %30 {strides = array<i32>} : memref<16x128xf32, #tpu.memory_space<vmem>>, vector<16x128xf32>,
    return
  }
  func.func @transform_0(%arg0: i32) -> (i32, i32) {
    %c0_i32 = arith.constant 0 : i32
    %c0_i32_0 = arith.constant 0 : i32
    return %arg0, %c0_i32 : i32, i32
  }
  func.func @transform_1(%arg0: i32) -> (i32, i32) {
    %c0_i32 = arith.constant 0 : i32
    %c0_i32_0 = arith.constant 0 : i32
    %c0_i32_1 = arith.constant 0 : i32
    return %c0_i32, %c0_i32_0 : i32, i32
  }
  func.func @transform_2(%arg0: i32) -> (i32, i32) {
    %c0_i32 = arith.constant 0 : i32
    %c0_i32_0 = arith.constant 0 : i32
    %c0_i32_1 = arith.constant 0 : i32
    return %c0_i32, %c0_i32_0 : i32, i32
  }
  func.func @transform_3(%arg0: i32) -> (i32, i32) {
    %c0_i32 = arith.constant 0 : i32
    %c0_i32_0 = arith.constant 0 : i32
    %c0_i32_1 = arith.constant 0 : i32
    return %c0_i32, %c0_i32_0 : i32, i32
  }
  func.func @transform_4(%arg0: i32) -> (i32, i32) {
    %c0_i32 = arith.constant 0 : i32
    %c0_i32_0 = arith.constant 0 : i32
    %c0_i32_1 = arith.constant 0 : i32
    return %c0_i32, %c0_i32_0 : i32, i32
  }
  func.func @transform_5(%arg0: i32) -> (i32, i32) {
    %c0_i32 = arith.constant 0 : i32
    %c0_i32_0 = arith.constant 0 : i32
    %c0_i32_1 = arith.constant 0 : i32
    return %c0_i32, %c0_i32_0 : i32, i32
  }
  func.func @transform_6(%arg0: i32) -> (i32, i32) {
    %c0_i32 = arith.constant 0 : i32
    %c0_i32_0 = arith.constant 0 : i32
    %c0_i32_1 = arith.constant 0 : i32
    return %c0_i32, %c0_i32_0 : i32, i32
  }
  func.func @transform_7(%arg0: i32) -> (i32, i32) {
    %c0_i32 = arith.constant 0 : i32
    %c0_i32_0 = arith.constant 0 : i32
    return %arg0, %c0_i32 : i32, i32
  }
}

</mosaic_0001>

<llo_original>
// kernel: _fused_forward.1
$region0: #{_fused_forward.1}
  #allocation0 [shape = 'u32[]', space=smem, size = 0x4, offset = 0x4, fixed_abs, tag = 'smem constant byte address 0x4 - core index']
  #allocation1 [shape = 'u32[72,128]{1,0:T(1,128)}', space=vmem, size = 0x9000, scoped, tag = 'internal scratch']
  %s0 = inlined_call_operand.hbm [shape: bf16[16,128], index: 0, kind: input, shape index: {}]
  %s1 = inlined_call_operand.hbm [shape: bf16[128,128], index: 1, kind: input, shape index: {}]
  %s2 = inlined_call_operand.vmem [shape: f32[1,128], index: 2, kind: input, shape index: {}]
  %s3 = inlined_call_operand.hbm [shape: bf16[128,128], index: 3, kind: input, shape index: {}]
  %s4 = inlined_call_operand.vmem [shape: f32[1,128], index: 4, kind: input, shape index: {}]
  %s5 = inlined_call_operand.hbm [shape: bf16[128,128], index: 5, kind: input, shape index: {}]
  %s6 = inlined_call_operand.vmem [shape: f32[1,128], index: 6, kind: input, shape index: {}]
  %s7 = inlined_call_operand.hbm [shape: f32[16,128], index: 7, kind: output, shape index: {}]
  %s8 = sld [smem:[#allocation0]]
  $region54: #{_fused_forward.1} parent=0
    _
  %s10 = ssub.s32 1, %s8
  %s11 = scalar_select 0, %s10, %s8
  $region1: #{_fused_forward.1} parent=0
    #allocation2 [shape = 'u8[4096]{0}', space=vmem, size = 0x1000, scoped, tag = 'input window, operand 0, single buffered']
    #allocation3 [shape = 's32[1]{0}', space=sflag, size = 0x4, scoped, tag = 'scoped memory for _fused_forward.1']
    #allocation4 [shape = 's32[1]{0}', space=sflag, size = 0x4, scoped, tag = 'scoped memory for _fused_forward.1']
    #allocation5 [shape = 'u8[32768]{0}', space=vmem, size = 0x8000, scoped, tag = 'input window, operand 1, single buffered']
    #allocation6 [shape = 's32[1]{0}', space=sflag, size = 0x4, scoped, tag = 'scoped memory for _fused_forward.1']
    #allocation7 [shape = 'u8[32768]{0}', space=vmem, size = 0x8000, scoped, tag = 'input window, operand 3, single buffered']
    #allocation8 [shape = 'u8[32768]{0}', space=vmem, size = 0x8000, scoped, tag = 'input window, operand 5, single buffered']
    #allocation9 [shape = 's32[1]{0}', space=sflag, size = 0x4, scoped, tag = 'scoped memory for _fused_forward.1']
    #allocation10 [shape = 'u8[8192]{0}', space=vmem, size = 0x2000, scoped, tag = 'output window, operand 0, single buffered']
    %12 = vsyncpa [#allocation3], 0
    %13 = vsyncpa [#allocation6], 0
    %14 = vsyncpa [#allocation9], 0
    %15 = vsyncpa [#allocation4], 0
    // Predicated region
    $region2: #{_fused_forward.1} parent=1 // pred_check
      _
    $region3: #{_fused_forward.1} parent=1 // pred_check_branch
      %17 = sbr.rel (0) target = $region5
    $region4: #{_fused_forward.1} parent=1 // pred_region
      %19 = vsyncadd [#allocation3], 0
      %s20 = sshll.u32 %s0, 4
      %s21 = int_to_ptr.hbm [resolvable:$true] %s20
      %s22 = sshll.u32 [#allocation2], 4
      %s23 = int_to_ptr.vmem [resolvable:$true] %s22
      %28 = dma.hbm_to_vmem [thread:$0]  %s21, 128, %s23, [#allocation3], 64, 64, 4
    $region5: #{_fused_forward.1} parent=1 // pred_fallthru
      _
    // Predicated region
    $region6: #{_fused_forward.1} parent=1 // pred_check
      _
    $region7: #{_fused_forward.1} parent=1 // pred_check_branch
      %30 = sbr.rel (0) target = $region9
    $region8: #{_fused_forward.1} parent=1 // pred_region
      %32 = vsyncadd [#allocation6], 0
      %s33 = sshll.u32 %s1, 4
      %s34 = int_to_ptr.hbm [resolvable:$true] %s33
      %s35 = sshll.u32 [#allocation5], 4
      %s36 = int_to_ptr.vmem [resolvable:$true] %s35
      %41 = dma.hbm_to_vmem [thread:$0]  %s34, 1024, %s36, [#allocation6], 64, 64, 4
    $region9: #{_fused_forward.1} parent=1 // pred_fallthru
      _
    // Predicated region
    $region10: #{_fused_forward.1} parent=1 // pred_check
      _
    $region11: #{_fused_forward.1} parent=1 // pred_check_branch
      %43 = sbr.rel (0) target = $region13
    $region12: #{_fused_forward.1} parent=1 // pred_region
      _
    $region13: #{_fused_forward.1} parent=1 // pred_fallthru
      _
    // Predicated region
    $region14: #{_fused_forward.1} parent=1 // pred_check
      _
    $region15: #{_fused_forward.1} parent=1 // pred_check_branch
      %45 = sbr.rel (0) target = $region17
    $region16: #{_fused_forward.1} parent=1 // pred_region
      %47 = vsyncadd [#allocation6], 0
      %s48 = sshll.u32 %s3, 4
      %s49 = int_to_ptr.hbm [resolvable:$true] %s48
      %s50 = sshll.u32 [#allocation7], 4
      %s51 = int_to_ptr.vmem [resolvable:$true] %s50
      %56 = dma.hbm_to_vmem [thread:$0]  %s49, 1024, %s51, [#allocation6], 64, 64, 4
    $region17: #{_fused_forward.1} parent=1 // pred_fallthru
      _
    // Predicated region
    $region18: #{_fused_forward.1} parent=1 // pred_check
      _
    $region19: #{_fused_forward.1} parent=1 // pred_check_branch
      %58 = sbr.rel (0) target = $region21
    $region20: #{_fused_forward.1} parent=1 // pred_region
      _
    $region21: #{_fused_forward.1} parent=1 // pred_fallthru
      _
    // Predicated region
    $region22: #{_fused_forward.1} parent=1 // pred_check
      _
    $region23: #{_fused_forward.1} parent=1 // pred_check_branch
      %60 = sbr.rel (0) target = $region25
    $region24: #{_fused_forward.1} parent=1 // pred_region
      %62 = vsyncadd [#allocation9], 0
      %s63 = sshll.u32 %s5, 4
      %s64 = int_to_ptr.hbm [resolvable:$true] %s63
      %s65 = sshll.u32 [#allocation8], 4
      %s66 = int_to_ptr.vmem [resolvable:$true] %s65
      %71 = dma.hbm_to_vmem [thread:$0]  %s64, 1024, %s66, [#allocation9], 64, 64, 4
    $region25: #{_fused_forward.1} parent=1 // pred_fallthru
      _
    // Predicated region
    $region26: #{_fused_forward.1} parent=1 // pred_check
      _
    $region27: #{_fused_forward.1} parent=1 // pred_check_branch
      %73 = sbr.rel (0) target = $region29
    $region28: #{_fused_forward.1} parent=1 // pred_region
      _
    $region29: #{_fused_forward.1} parent=1 // pred_fallthru
      _
    // Predicated region
    $region30: #{_fused_forward.1} parent=1 // pred_check
      _
    $region31: #{_fused_forward.1} parent=1 // pred_check_branch
      %75 = sbr.rel (0) target = $region33
    $region32: #{_fused_forward.1} parent=1 // pred_region
      %77 = dma.done [#allocation3], 128
    $region33: #{_fused_forward.1} parent=1 // pred_fallthru
      _
    // Predicated region
    $region34: #{_fused_forward.1} parent=1 // pred_check
      _
    $region35: #{_fused_forward.1} parent=1 // pred_check_branch
      %79 = sbr.rel (0) target = $region37
    $region36: #{_fused_forward.1} parent=1 // pred_region
      %81 = dma.done [#allocation6], 1024
    $region37: #{_fused_forward.1} parent=1 // pred_fallthru
      _
    // Predicated region
    $region38: #{_fused_forward.1} parent=1 // pred_check
      _
    $region39: #{_fused_forward.1} parent=1 // pred_check_branch
      %83 = sbr.rel (0) target = $region41
    $region40: #{_fused_forward.1} parent=1 // pred_region
      %85 = dma.done [#allocation6], 1024
    $region41: #{_fused_forward.1} parent=1 // pred_fallthru
      _
    // Predicated region
    $region42: #{_fused_forward.1} parent=1 // pred_check
      _
    $region43: #{_fused_forward.1} parent=1 // pred_check_branch
      %87 = sbr.rel (0) target = $region45
    $region44: #{_fused_forward.1} parent=1 // pred_region
      %89 = dma.done [#allocation9], 1024
    $region45: #{_fused_forward.1} parent=1 // pred_fallthru
      _
    %v90 = vld [vmem:[#allocation2] sm:$0xf]
    %v91 = vld [vmem:[#allocation2 + $0x4] sm:$0xf]
    %v92 = vld [vmem:[#allocation5] sm:$0xf]
    %v93 = vld [vmem:[#allocation5 + $0x4] sm:$0xf]
    %v94 = vld [vmem:[#allocation5 + $0x8] sm:$0xf]
    %v95 = vld [vmem:[#allocation5 + $0xc] sm:$0xf]
    %v96 = vld [vmem:[#allocation5 + $0x10] sm:$0xf]
    %v97 = vld [vmem:[#allocation5 + $0x14] sm:$0xf]
    %v98 = vld [vmem:[#allocation5 + $0x18] sm:$0xf]
    %v99 = vld [vmem:[#allocation5 + $0x1c] sm:$0xf]
    %v100 = vld [vmem:[#allocation5 + $0x20] sm:$0xf]
    %v101 = vld [vmem:[#allocation5 + $0x24] sm:$0xf]
    %v102 = vld [vmem:[#allocation5 + $0x28] sm:$0xf]
    %v103 = vld [vmem:[#allocation5 + $0x2c] sm:$0xf]
    %v104 = vld [vmem:[#allocation5 + $0x30] sm:$0xf]
    %v105 = vld [vmem:[#allocation5 + $0x34] sm:$0xf]
    %v106 = vld [vmem:[#allocation5 + $0x38] sm:$0xf]
    %v107 = vld [vmem:[#allocation5 + $0x3c] sm:$0xf]
    %v108 = vld [vmem:[%s2] sm:$0x1]
    %v110 = vperm.slane %v108, 0
    %v114 = vunpack.c.l.b16 %v90
    %v115 = vunpack.c.l.b16 %v91
    %v116 = vpack.c.b16 %v115, %v114
    %v134 = vunpack.c.l.b16 %v92
    %v135 = vunpack.c.l.b16 %v93
    %v136 = vunpack.c.l.b16 %v94
    %v137 = vunpack.c.l.b16 %v95
    %v138 = vunpack.c.l.b16 %v96
    %v139 = vunpack.c.l.b16 %v97
    %v140 = vunpack.c.l.b16 %v98
    %v141 = vunpack.c.l.b16 %v99
    %v142 = vunpack.c.l.b16 %v100
    %v143 = vunpack.c.l.b16 %v101
    %v144 = vunpack.c.l.b16 %v102
    %v145 = vunpack.c.l.b16 %v103
    %v146 = vunpack.c.l.b16 %v104
    %v147 = vunpack.c.l.b16 %v105
    %v148 = vunpack.c.l.b16 %v106
    %v149 = vunpack.c.l.b16 %v107
    %v150 = vpack.c.b16 %v135, %v134
    %v151 = vpack.c.b16 %v137, %v136
    %v152 = vpack.c.b16 %v139, %v138
    %v153 = vpack.c.b16 %v141, %v140
    %v154 = vpack.c.b16 %v143, %v142
    %v155 = vpack.c.b16 %v145, %v144
    %v156 = vpack.c.b16 %v147, %v146
    %v157 = vpack.c.b16 %v149, %v148
    %166 = vmatpush.bf16.msra.mxu0 %v157
    %167 = vmatpush.bf16.msra.mxu0 %v156
    %168 = vmatpush.bf16.msra.mxu0 %v155
    %169 = vmatpush.bf16.msra.mxu0 %v154
    %170 = vmatpush.bf16.msra.mxu0 %v153
    %171 = vmatpush.bf16.msra.mxu0 %v152
    %172 = vmatpush.bf16.msra.mxu0 %v151
    %173 = vmatpush.bf16.msra.mxu0 %v150
    %174 = vmatmul.bf16.gmra.mxu0 %v116
    %v175 = vpop.f32.mrf.mxu0
    %v176 = vadd.f32 %v110, %v175
    %v177 = vpop.f32.mrf.mxu0
    %v178 = vadd.f32 %v110, %v177
    %179 = vdwg.mxu0
    %v180 = vmax.f32 %v176, 0.0
    %v181 = vmax.f32 %v178, 0.0
    %v182 = vpack.c.bf16 %v181, %v180
    %v183 = vld [vmem:[#allocation7] sm:$0xf]
    %v184 = vld [vmem:[#allocation7 + $0x4] sm:$0xf]
    %v185 = vld [vmem:[#allocation7 + $0x8] sm:$0xf]
    %v186 = vld [vmem:[#allocation7 + $0xc] sm:$0xf]
    %v187 = vld [vmem:[#allocation7 + $0x10] sm:$0xf]
    %v188 = vld [vmem:[#allocation7 + $0x14] sm:$0xf]
    %v189 = vld [vmem:[#allocation7 + $0x18] sm:$0xf]
    %v190 = vld [vmem:[#allocation7 + $0x1c] sm:$0xf]
    %v191 = vld [vmem:[#allocation7 + $0x20] sm:$0xf]
    %v192 = vld [vmem:[#allocation7 + $0x24] sm:$0xf]
    %v193 = vld [vmem:[#allocation7 + $0x28] sm:$0xf]
    %v194 = vld [vmem:[#allocation7 + $0x2c] sm:$0xf]
    %v195 = vld [vmem:[#allocation7 + $0x30] sm:$0xf]
    %v196 = vld [vmem:[#allocation7 + $0x34] sm:$0xf]
    %v197 = vld [vmem:[#allocation7 + $0x38] sm:$0xf]
    %v198 = vld [vmem:[#allocation7 + $0x3c] sm:$0xf]
    %v199 = vld [vmem:[%s4] sm:$0x1]
    %v201 = vperm.slane %v199, 0
    %v219 = vunpack.c.l.b16 %v183
    %v220 = vunpack.c.l.b16 %v184
    %v221 = vunpack.c.l.b16 %v185
    %v222 = vunpack.c.l.b16 %v186
    %v223 = vunpack.c.l.b16 %v187
    %v224 = vunpack.c.l.b16 %v188
    %v225 = vunpack.c.l.b16 %v189
    %v226 = vunpack.c.l.b16 %v190
    %v227 = vunpack.c.l.b16 %v191
    %v228 = vunpack.c.l.b16 %v192
    %v229 = vunpack.c.l.b16 %v193
    %v230 = vunpack.c.l.b16 %v194
    %v231 = vunpack.c.l.b16 %v195
    %v232 = vunpack.c.l.b16 %v196
    %v233 = vunpack.c.l.b16 %v197
    %v234 = vunpack.c.l.b16 %v198
    %v235 = vpack.c.b16 %v220, %v219
    %v236 = vpack.c.b16 %v222, %v221
    %v237 = vpack.c.b16 %v224, %v223
    %v238 = vpack.c.b16 %v226, %v225
    %v239 = vpack.c.b16 %v228, %v227
    %v240 = vpack.c.b16 %v230, %v229
    %v241 = vpack.c.b16 %v232, %v231
    %v242 = vpack.c.b16 %v234, %v233
    %251 = vmatpush.bf16.msra.mxu0 %v242
    %252 = vmatpush.bf16.msra.mxu0 %v241
    %253 = vmatpush.bf16.msra.mxu0 %v240
    %254 = vmatpush.bf16.msra.mxu0 %v239
    %255 = vmatpush.bf16.msra.mxu0 %v238
    %256 = vmatpush.bf16.msra.mxu0 %v237
    %257 = vmatpush.bf16.msra.mxu0 %v236
    %258 = vmatpush.bf16.msra.mxu0 %v235
    %259 = vmatmul.bf16.gmra.mxu0 %v182
    %v260 = vpop.f32.mrf.mxu0
    %v261 = vadd.f32 %v201, %v260
    %v262 = vpop.f32.mrf.mxu0
    %v263 = vadd.f32 %v201, %v262
    %264 = vdwg.mxu0
    %v265 = vmax.f32 %v261, 0.0
    %v266 = vmax.f32 %v263, 0.0
    %v267 = vpack.c.bf16 %v266, %v265
    %v268 = vld [vmem:[#allocation8] sm:$0xf]
    %v269 = vld [vmem:[#allocation8 + $0x4] sm:$0xf]
    %v270 = vld [vmem:[#allocation8 + $0x8] sm:$0xf]
    %v271 = vld [vmem:[#allocation8 + $0xc] sm:$0xf]
    %v272 = vld [vmem:[#allocation8 + $0x10] sm:$0xf]
    %v273 = vld [vmem:[#allocation8 + $0x14] sm:$0xf]
    %v274 = vld [vmem:[#allocation8 + $0x18] sm:$0xf]
    %v275 = vld [vmem:[#allocation8 + $0x1c] sm:$0xf]
    %v276 = vld [vmem:[#allocation8 + $0x20] sm:$0xf]
    %v277 = vld [vmem:[#allocation8 + $0x24] sm:$0xf]
    %v278 = vld [vmem:[#allocation8 + $0x28] sm:$0xf]
    %v279 = vld [vmem:[#allocation8 + $0x2c] sm:$0xf]
    %v280 = vld [vmem:[#allocation8 + $0x30] sm:$0xf]
    %v281 = vld [vmem:[#allocation8 + $0x34] sm:$0xf]
    %v282 = vld [vmem:[#allocation8 + $0x38] sm:$0xf]
    %v283 = vld [vmem:[#allocation8 + $0x3c] sm:$0xf]
    %v284 = vld [vmem:[%s6] sm:$0x1]
    %v286 = vperm.slane %v284, 0
    %v304 = vunpack.c.l.b16 %v268
    %v305 = vunpack.c.l.b16 %v269
    %v306 = vunpack.c.l.b16 %v270
    %v307 = vunpack.c.l.b16 %v271
    %v308 = vunpack.c.l.b16 %v272
    %v309 = vunpack.c.l.b16 %v273
    %v310 = vunpack.c.l.b16 %v274
    %v311 = vunpack.c.l.b16 %v275
    %v312 = vunpack.c.l.b16 %v276
    %v313 = vunpack.c.l.b16 %v277
    %v314 = vunpack.c.l.b16 %v278
    %v315 = vunpack.c.l.b16 %v279
    %v316 = vunpack.c.l.b16 %v280
    %v317 = vunpack.c.l.b16 %v281
    %v318 = vunpack.c.l.b16 %v282
    %v319 = vunpack.c.l.b16 %v283
    %v320 = vpack.c.b16 %v305, %v304
    %v321 = vpack.c.b16 %v307, %v306
    %v322 = vpack.c.b16 %v309, %v308
    %v323 = vpack.c.b16 %v311, %v310
    %v324 = vpack.c.b16 %v313, %v312
    %v325 = vpack.c.b16 %v315, %v314
    %v326 = vpack.c.b16 %v317, %v316
    %v327 = vpack.c.b16 %v319, %v318
    %336 = vmatpush.bf16.msra.mxu0 %v327
    %337 = vmatpush.bf16.msra.mxu0 %v326
    %338 = vmatpush.bf16.msra.mxu0 %v325
    %339 = vmatpush.bf16.msra.mxu0 %v324
    %340 = vmatpush.bf16.msra.mxu0 %v323
    %341 = vmatpush.bf16.msra.mxu0 %v322
    %342 = vmatpush.bf16.msra.mxu0 %v321
    %343 = vmatpush.bf16.msra.mxu0 %v320
    %344 = vmatmul.bf16.gmra.mxu0 %v267
    %v345 = vpop.f32.mrf.mxu0
    %v346 = vadd.f32 %v286, %v345
    %v347 = vpop.f32.mrf.mxu0
    %v348 = vadd.f32 %v286, %v347
    %349 = vdwg.mxu0
    %350 = vmax.xlane.f32.xlu0 %v346
    %v351 = vpop.xlane.xlu0 %350
    %352 = vmax.xlane.f32.xlu0 %v348
    %v353 = vpop.xlane.xlu0 %352
    %v354 = vsub.f32 %v346, %v351
    %v355 = vsub.f32 %v348, %v353
    %v356 = vmul.f32 %v354, 1.442695
    %v357 = vpow.pop %v356
    %v358 = vmul.f32 %v355, 1.442695
    %v359 = vpow.pop %v358
    %360 = vadd.xlane.f32.xlu0 %v357
    %v361 = vpop.xlane.xlu0 %360
    %362 = vadd.xlane.f32.xlu0 %v359
    %v363 = vpop.xlane.xlu0 %362
    %v364 = vrcp.pop %v361
    %v365 = vmul.f32 %v361, %v364
    %v366 = vsub.f32 1.0, %v365
    %v367 = vmul.f32 %v364, %v366
    %v368 = vadd.f32 %v364, %v367
    %vm369 = vweird.f32 %v361
    %vm370 = vweird.f32 %v364
    %vm371 = vmor %vm369, %vm370
    %v372 = vsel %vm371, %v364, %v368
    %v373 = vand.u32 2147483647, %v361
    %vm374 = vcmp.eq.f32.partialorder %v373, 8.507059e+37
    %v375 = vand.u32 %v361, 2147483648
    %v376 = vor.u32 1.1754944e-38, %v375
    %v377 = vsel %vm374, %v376, %v372
    %v378 = vmul.f32 %v357, %v377
    %v379 = vrcp.pop %v363
    %v380 = vmul.f32 %v363, %v379
    %v381 = vsub.f32 1.0, %v380
    %v382 = vmul.f32 %v379, %v381
    %v383 = vadd.f32 %v379, %v382
    %vm384 = vweird.f32 %v363
    %vm385 = vweird.f32 %v379
    %vm386 = vmor %vm384, %vm385
    %v387 = vsel %vm386, %v379, %v383
    %v388 = vand.u32 2147483647, %v363
    %vm389 = vcmp.eq.f32.partialorder %v388, 8.507059e+37
    %v390 = vand.u32 %v363, 2147483648
    %v391 = vor.u32 1.1754944e-38, %v390
    %v392 = vsel %vm389, %v391, %v387
    %v393 = vmul.f32 %v359, %v392
    %394 = vst [vmem:[#allocation10] sm:$0xff] %v378
    %395 = vst [vmem:[#allocation10 + $0x8] sm:$0xff] %v393
    // Predicated region
    $region46: #{_fused_forward.1} parent=1 // pred_check
      _
    $region47: #{_fused_forward.1} parent=1 // pred_check_branch
      %397 = sbr.rel (0) target = $region49
    $region48: #{_fused_forward.1} parent=1 // pred_region
      %399 = vsyncadd [#allocation4], 0
      %s400 = sshll.u32 [#allocation10], 4
      %s401 = int_to_ptr.vmem [resolvable:$true] %s400
      %s402 = sshll.u32 %s7, 4
      %s403 = int_to_ptr.hbm [resolvable:$true] %s402
      %408 = dma.vmem_to_hbm [thread:$0]  %s401, 256, %s403, [#allocation4], 128, 128, 8
    $region49: #{_fused_forward.1} parent=1 // pred_fallthru
      _
    // Predicated region
    $region50: #{_fused_forward.1} parent=1 // pred_check
      _
    $region51: #{_fused_forward.1} parent=1 // pred_check_branch
      %410 = sbr.rel (0) target = $region53
    $region52: #{_fused_forward.1} parent=1 // pred_region
      %412 = dma.done [#allocation4], 256
    $region53: #{_fused_forward.1} parent=1 // pred_fallthru
      _
    %413 = vsyncpa [#allocation3], 1
    %414 = vsyncpa [#allocation6], 1
    %415 = vsyncpa [#allocation9], 1
    %416 = vsyncpa [#allocation4], 1

</llo_original>
